<compile_context>
chip_gen: v5e
topology: v5e:2x2
jax: 0.10.0
libtpu: 0.0.40
codegen_flags: <defaults>
</compile_context>

<pallas_src>
import functools
import math

import jax
import jax.numpy as jnp
from jax import lax
from jax.experimental import pallas as pl
from jax.experimental.pallas import tpu as pltpu


def _supcon_kernel(q_ref, k_ref, labc_ref, labr_ref, loss_ref, valid_ref,
                   sum_exp, sum_pos, num_pos,
                   *, inv_temp, temperature, scale_by_temperature):
    """One (block_q x block_k) tile of the supervised-contrastive loss."""
    i = pl.program_id(0)
    kk = pl.program_id(1)
    tq = q_ref.shape[0]
    tk = k_ref.shape[0]

    @pl.when(kk == 0)
    def _init():
        sum_exp[...] = jnp.zeros_like(sum_exp)
        sum_pos[...] = jnp.zeros_like(sum_pos)
        num_pos[...] = jnp.zeros_like(num_pos)

    # Operands are pre-normalized, pre-scaled by sqrt(1/T) and pre-cast to bf16 in
    # the wrapper, so s == (f_norm @ f_norm.T) / T.  Contract dim 1 of BOTH
    # operands (no k.T materialization), accumulate in f32 on the MXU.
    s = lax.dot_general(q_ref[...], k_ref[...], (((1,), (1,)), ((), ())),
                        preferred_element_type=jnp.float32)            # (tq, tk)

    # Constant per-row shift (diagonal/self logit ~= 1/T) keeps exp() in range;
    # the final log-probs are exactly invariant to any per-row shift.
    logits = s - inv_temp
    exp_l = jnp.exp(logits)

    # Pairwise label mask as a broadcast compare (tq,1)==(1,tk): VPU only.
    same_lab = labc_ref[...] == labr_ref[...]                          # (tq, tk) bool
    # Explicit diagonal mask from global indices (robust to bf16 rounding of the
    # self dot-product; no reliance on logits[i,i] == 0 exactly).
    row_ids = i * tq + lax.broadcasted_iota(jnp.int32, (tq, 1), 0)
    col_ids = kk * tk + lax.broadcasted_iota(jnp.int32, (1, tk), 1)
    not_diag = row_ids != col_ids
    pos = jnp.logical_and(same_lab, not_diag)

    # Note: assumes the key axis covers every one of the B rows exactly once
    # (full grid over B); do not sub-sample/pad keys without revisiting this.
    sum_exp[...] += jnp.sum(jnp.where(not_diag, exp_l, 0.0), axis=1, keepdims=True)
    sum_pos[...] += jnp.sum(jnp.where(pos, logits, 0.0), axis=1, keepdims=True)
    num_pos[...] += jnp.sum(jnp.where(pos, 1.0, 0.0), axis=1, keepdims=True)

    @pl.when(kk == pl.num_programs(1) - 1)
    def _finalize():
        npos = num_pos[...]                                            # (tq, 1)
        valid = npos > 0.0
        # sum over positives of log_probs = sum_pos - npos * log(denominator)
        row = sum_pos[...] - npos * jnp.log(sum_exp[...])
        per_row = jnp.where(valid, row / jnp.where(valid, npos, 1.0), 0.0)
        loss_rows = -per_row
        if scale_by_temperature:
            loss_rows = loss_rows * temperature
        loss_ref[...] = loss_rows
        valid_ref[...] = valid.astype(jnp.float32)


_BQ_CANDIDATES = (1024, 512, 256, 128, 64, 32, 16, 8)   # query rows (bf16 quantum 16 preferred)
_BK_CANDIDATES = (512, 256, 128)                         # key rows, lane-dense multiples of 128


def _vmem_estimate(bq, bk, d, operand_itemsize=2):
    operands = 2 * (bq + bk) * d * operand_itemsize   # double-buffered bf16 q/k tiles
    temps = 6 * bq * bk * 4                            # live f32 (tq,tk) temporaries
    small = 8 * bq * 128 * 4                           # accumulators/outputs/labels (lane-padded)
    return operands + temps + small


def _choose_tiles(b, d, budget_bytes=24 * 2**20):
    """Largest query tile first (arithmetic intensity), under a VMEM budget."""
    bq_opts = [c for c in _BQ_CANDIDATES if c <= b and b % c == 0] or [b]
    bk_opts = [c for c in _BK_CANDIDATES if c <= b and b % c == 0] or [b]
    for bq in bq_opts:
        for bk in bk_opts:
            if _vmem_estimate(bq, bk, d) <= budget_bytes:
                return bq, bk
    return bq_opts[-1], bk_opts[-1]


def extension_loss(features, labels, *, temperature=0.5, scale_by_temperature=True,
                   block_q=None, block_k=None):
    """features: (B, D) float, labels: (B,) int. Returns the scalar Extension loss."""
    # TODO(synk): only the `labels` path of the PyTorch module is implemented; the
    # explicit pairwise `mask=` argument and the labels=None identity-mask path
    # (which has zero positives per row and NaNs in torch) are not.
    if temperature <= 0.0:
        raise ValueError("temperature must be > 0 (PyTorch default 0.0 is degenerate)")
    B, D = features.shape

    # ---- Hoisted prologue (one cheap memory-bound pass, outside the kernel) ----
    # F.normalize(p=2, dim=1, eps=1e-12) in f32, fold sqrt(1/T) into the operand so
    # the MXU produces (f @ f.T)/T directly, cast once to bf16 for the MXU.
    f32 = features.astype(jnp.float32)
    f_n = f32 * lax.rsqrt(jnp.maximum(jnp.sum(f32 * f32, axis=1, keepdims=True), 1e-24))
    g = (f_n * math.sqrt(1.0 / temperature)).astype(jnp.bfloat16)

    labels_col = labels.reshape(B, 1).astype(jnp.int32)
    labels_row = labels.reshape(1, B).astype(jnp.int32)

    auto_bq, auto_bk = _choose_tiles(B, D)
    block_q = auto_bq if block_q is None else int(block_q)
    block_k = auto_bk if block_k is None else int(block_k)
    assert B % block_q == 0 and B % block_k == 0, (B, block_q, block_k)
    n_q, n_k = B // block_q, B // block_k

    # Explicit VMEM ask: v5e default scoped limit is 16 MiB; v7x has only 64 MiB
    # physical VMEM per TC, so cap well below that.
    vmem_limit = int(min(max(2 * _vmem_estimate(block_q, block_k, D), 16 * 2**20),
                         48 * 2**20))

    kernel = functools.partial(
        _supcon_kernel,
        inv_temp=float(1.0 / temperature),
        temperature=float(temperature),
        scale_by_temperature=bool(scale_by_temperature),
    )

    itemsize = 2  # bf16 operands
    cost = pl.CostEstimate(
        flops=2 * B * B * D,
        transcendentals=B * B,
        bytes_accessed=(n_q * B * D + B * D) * itemsize + 4 * B * 4,
    )

    loss_rows, valid = pl.pallas_call(
        kernel,
        out_shape=(jax.ShapeDtypeStruct((B, 1), jnp.float32),
                   jax.ShapeDtypeStruct((B, 1), jnp.float32)),
        grid_spec=pltpu.PrefetchScalarGridSpec(
            num_scalar_prefetch=0,
            grid=(n_q, n_k),
            in_specs=[
                pl.BlockSpec((block_q, D), lambda i, k: (i, 0)),   # query rows (resident over k)
                pl.BlockSpec((block_k, D), lambda i, k: (k, 0)),   # key rows (streamed)
                pl.BlockSpec((block_q, 1), lambda i, k: (i, 0)),   # labels, column layout
                pl.BlockSpec((1, block_k), lambda i, k: (0, k)),   # labels, lane-dense row
            ],
            out_specs=(
                pl.BlockSpec((block_q, 1), lambda i, k: (i, 0)),
                pl.BlockSpec((block_q, 1), lambda i, k: (i, 0)),
            ),
            scratch_shapes=[pltpu.VMEM((block_q, 1), jnp.float32)] * 3,
        ),
        compiler_params=pltpu.CompilerParams(
            dimension_semantics=("parallel", "arbitrary"),
            vmem_limit_bytes=vmem_limit),
        cost_estimate=cost,
    )(g, g, labels_col, labels_row)   # same pre-processed array as query AND key operand

    # Final masked mean over rows with >= 1 positive (B values, trivial) stays
    # outside the kernel so the row axis can remain "parallel".  count == 0 is
    # guarded (the PyTorch original would NaN there).
    count = jnp.sum(valid)
    return jnp.sum(loss_rows) / jnp.maximum(count, 1.0)


def extension_loss_ref(features, labels, *, temperature=0.5, scale_by_temperature=True):
    """Pure-JAX f32 transcription of the PyTorch forward (validation only)."""
    f = features.astype(jnp.float32)
    f = f / jnp.maximum(jnp.sqrt(jnp.sum(f * f, axis=1, keepdims=True)), 1e-12)
    B = f.shape[0]
    lab = labels.reshape(-1, 1)
    mask = (lab == lab.T).astype(jnp.float32)
    logits = (f @ f.T) / temperature
    logits = logits - jnp.max(logits, axis=1, keepdims=True)
    exp_logits = jnp.exp(logits)
    logits_mask = 1.0 - jnp.eye(B, dtype=jnp.float32)
    pos = mask * logits_mask
    neg = 1.0 - mask
    num_pos = jnp.sum(pos, axis=1)
    denom = jnp.sum(exp_logits * neg, axis=1, keepdims=True) + \
        jnp.sum(exp_logits * pos, axis=1, keepdims=True)
    log_probs = logits - jnp.log(denom)
    row = jnp.sum(log_probs * pos, axis=1)
    valid = num_pos > 0
    per_row = jnp.where(valid, row / jnp.where(valid, num_pos, 1.0), 0.0)
    loss_rows = -per_row
    if scale_by_temperature:
        loss_rows = loss_rows * temperature
    return jnp.sum(jnp.where(valid, loss_rows, 0.0)) / jnp.sum(valid.astype(jnp.float32))


if __name__ == "__main__":
    key = jax.random.PRNGKey(0)
    B, D = 256, 128
    features = jax.random.normal(key, (B, D), dtype=jnp.float32)
    labels = jnp.arange(B, dtype=jnp.int32) % 7      # every row has positives

    # Explicit small tiles exercise the "parallel" row axis, the key-accumulation
    # loop and the finalize path even at this small size.
    loss = extension_loss(features, labels, temperature=0.5,
                          scale_by_temperature=True, block_q=64, block_k=128)
    loss = jax.block_until_ready(loss)

    ref = extension_loss_ref(features, labels, temperature=0.5, scale_by_temperature=True)
    # bf16 MXU operands => agreement with the f32 reference at bf16-rounding level.
    assert jnp.allclose(loss, ref, atol=2e-2, rtol=2e-2), (loss, ref)

    # Auto-tiled path (single tile at this size).
    loss_auto = jax.block_until_ready(
        extension_loss(features, labels, temperature=0.5, scale_by_temperature=True))
    assert jnp.allclose(loss_auto, ref, atol=2e-2, rtol=2e-2), (loss_auto, ref)

    print("KERNEL_OK")
</pallas_src>

<mosaic_0001>
module attributes {stable_mosaic.version = 11 : i64} {
  func.func @_supcon_kernel(%arg0: i32, %arg1: i32, %arg2: memref<64x128xbf16, #tpu.memory_space<vmem>>, %arg3: memref<128x128xbf16, #tpu.memory_space<vmem>>, %arg4: memref<64x1xi32, #tpu.memory_space<vmem>>, %arg5: memref<1x128xi32, #tpu.memory_space<vmem>>, %arg6: memref<64x1xf32, #tpu.memory_space<vmem>>, %arg7: memref<64x1xf32, #tpu.memory_space<vmem>>, %arg8: memref<64x1xf32, #tpu.memory_space<vmem>>, %arg9: memref<64x1xf32, #tpu.memory_space<vmem>>, %arg10: memref<64x1xf32, #tpu.memory_space<vmem>>) attributes {dimension_semantics = [#tpu.dimension_semantics<parallel>, #tpu.dimension_semantics<arbitrary>], iteration_bounds = array<i64: 4, 2>, scalar_prefetch = 0 : i64, scratch_operands = 3 : i64, tpu.core_type = #tpu.core_type<tc>, window_params = [{transform_indices = @transform_0, window_bounds = array<i64: 64, 128>}, {transform_indices = @transform_1, window_bounds = array<i64: 128, 128>}, {transform_indices = @transform_2, window_bounds = array<i64: 64, 1>}, {transform_indices = @transform_3, window_bounds = array<i64: 1, 128>}, {transform_indices = @transform_4, window_bounds = array<i64: 64, 1>}, {transform_indices = @transform_5, window_bounds = array<i64: 64, 1>}]} {
    %c0_i32 = arith.constant 0 : i32
    %0 = arith.cmpi eq, %arg1, %c0_i32 : i32
    %1 = arith.extui %0 : i1 to i32
    %c0_i32_0 = arith.constant 0 : i32
    %2 = arith.cmpi ne, %1, %c0_i32_0 : i32
    scf.if %2 {
      %cst_29 = arith.constant 0.000000e+00 : f32
      %51 = vector.broadcast %cst_29 : f32 to vector<64x1xf32>
      %c0_30 = arith.constant 0 : index
      %c0_31 = arith.constant 0 : index
      %52 = vector.load %arg8[%c0_30, %c0_31] : memref<64x1xf32, #tpu.memory_space<vmem>>, vector<64x1xf32>
      tpu.vector_store %arg8[%c0_30, %c0_31], %51 {strides = array<i32>} : memref<64x1xf32, #tpu.memory_space<vmem>>, vector<64x1xf32>,
      %cst_32 = arith.constant 0.000000e+00 : f32
      %53 = vector.broadcast %cst_32 : f32 to vector<64x1xf32>
      %c0_33 = arith.constant 0 : index
      %c0_34 = arith.constant 0 : index
      %54 = vector.load %arg9[%c0_33, %c0_34] : memref<64x1xf32, #tpu.memory_space<vmem>>, vector<64x1xf32>
      tpu.vector_store %arg9[%c0_33, %c0_34], %53 {strides = array<i32>} : memref<64x1xf32, #tpu.memory_space<vmem>>, vector<64x1xf32>,
      %cst_35 = arith.constant 0.000000e+00 : f32
      %55 = vector.broadcast %cst_35 : f32 to vector<64x1xf32>
      %c0_36 = arith.constant 0 : index
      %c0_37 = arith.constant 0 : index
      %56 = vector.load %arg10[%c0_36, %c0_37] : memref<64x1xf32, #tpu.memory_space<vmem>>, vector<64x1xf32>
      tpu.vector_store %arg10[%c0_36, %c0_37], %55 {strides = array<i32>} : memref<64x1xf32, #tpu.memory_space<vmem>>, vector<64x1xf32>,
    } else {
    }
    %c0 = arith.constant 0 : index
    %c0_1 = arith.constant 0 : index
    %3 = vector.load %arg2[%c0, %c0_1] : memref<64x128xbf16, #tpu.memory_space<vmem>>, vector<64x128xbf16>
    %c0_2 = arith.constant 0 : index
    %c0_3 = arith.constant 0 : index
    %4 = vector.load %arg3[%c0_2, %c0_3] : memref<128x128xbf16, #tpu.memory_space<vmem>>, vector<128x128xbf16>
    %cst = arith.constant dense<0.000000e+00> : vector<64x128xf32>
    %5 = tpu.matmul %3, %4, %cst {dimension_numbers = #tpu.dot_dimension_numbers<[1], [1], [0], [0], [0, 0, 1, 0], [], []>} : vector<64x128xbf16>, vector<128x128xbf16>, vector<64x128xf32> -> vector<64x128xf32>
    %cst_4 = arith.constant 2.000000e+00 : f32
    %6 = vector.broadcast %cst_4 : f32 to vector<64x128xf32>
    %7 = arith.subf %5, %6 : vector<64x128xf32>
    %8 = math.exp %7 : vector<64x128xf32>
    %c0_5 = arith.constant 0 : index
    %c0_6 = arith.constant 0 : index
    %9 = vector.load %arg4[%c0_5, %c0_6] : memref<64x1xi32, #tpu.memory_space<vmem>>, vector<64x1xi32>
    %c0_7 = arith.constant 0 : index
    %c0_8 = arith.constant 0 : index
    %10 = vector.load %arg5[%c0_7, %c0_8] : memref<1x128xi32, #tpu.memory_space<vmem>>, vector<1x128xi32>
    %11 = vector.broadcast %9 : vector<64x1xi32> to vector<64x128xi32>
    %12 = vector.broadcast %10 : vector<1x128xi32> to vector<64x128xi32>
    %13 = arith.cmpi eq, %11, %12 : vector<64x128xi32>
    %c64_i32 = arith.constant 64 : i32
    %14 = arith.muli %arg0, %c64_i32 : i32
    %15 = tpu.iota {dimensions = array<i32: 0>} : vector<64x1xi32>
    %16 = vector.broadcast %14 : i32 to vector<64x1xi32>
    %17 = arith.addi %16, %15 : vector<64x1xi32>
    %c128_i32 = arith.constant 128 : i32
    %18 = arith.muli %arg1, %c128_i32 : i32
    %19 = tpu.iota {dimensions = array<i32: 1>} : vector<1x128xi32>
    %20 = vector.broadcast %18 : i32 to vector<1x128xi32>
    %21 = arith.addi %20, %19 : vector<1x128xi32>
    %22 = vector.broadcast %17 : vector<64x1xi32> to vector<64x128xi32>
    %23 = vector.broadcast %21 : vector<1x128xi32> to vector<64x128xi32>
    %24 = arith.cmpi ne, %22, %23 : vector<64x128xi32>
    %25 = arith.andi %13, %24 : vector<64x128xi1>
    %c0_9 = arith.constant 0 : index
    %c0_10 = arith.constant 0 : index
    %26 = vector.load %arg8[%c0_9, %c0_10] : memref<64x1xf32, #tpu.memory_space<vmem>>, vector<64x1xf32>
    %cst_11 = arith.constant 0.000000e+00 : f32
    %27 = vector.broadcast %cst_11 : f32 to vector<64x128xf32>
    %28 = arith.select %24, %8, %27 : vector<64x128xi1>, vector<64x128xf32>
    %cst_12 = arith.constant dense<0.000000e+00> : vector<64xf32>
    %29 = vector.multi_reduction <add>, %28, %cst_12 [1] : vector<64x128xf32> to vector<64xf32>
    %30 = vector.shape_cast %29 : vector<64xf32> to vector<64x1xf32>
    %31 = arith.addf %26, %30 : vector<64x1xf32>
    %c0_13 = arith.constant 0 : index
    %c0_14 = arith.constant 0 : index
    %32 = vector.load %arg8[%c0_13, %c0_14] : memref<64x1xf32, #tpu.memory_space<vmem>>, vector<64x1xf32>
    tpu.vector_store %arg8[%c0_13, %c0_14], %31 {strides = array<i32>} : memref<64x1xf32, #tpu.memory_space<vmem>>, vector<64x1xf32>,
    %c0_15 = arith.constant 0 : index
    %c0_16 = arith.constant 0 : index
    %33 = vector.load %arg9[%c0_15, %c0_16] : memref<64x1xf32, #tpu.memory_space<vmem>>, vector<64x1xf32>
    %cst_17 = arith.constant 0.000000e+00 : f32
    %34 = vector.broadcast %cst_17 : f32 to vector<64x128xf32>
    %35 = arith.select %25, %7, %34 : vector<64x128xi1>, vector<64x128xf32>
    %cst_18 = arith.constant dense<0.000000e+00> : vector<64xf32>
    %36 = vector.multi_reduction <add>, %35, %cst_18 [1] : vector<64x128xf32> to vector<64xf32>
    %37 = vector.shape_cast %36 : vector<64xf32> to vector<64x1xf32>
    %38 = arith.addf %33, %37 : vector<64x1xf32>
    %c0_19 = arith.constant 0 : index
    %c0_20 = arith.constant 0 : index
    %39 = vector.load %arg9[%c0_19, %c0_20] : memref<64x1xf32, #tpu.memory_space<vmem>>, vector<64x1xf32>
    tpu.vector_store %arg9[%c0_19, %c0_20], %38 {strides = array<i32>} : memref<64x1xf32, #tpu.memory_space<vmem>>, vector<64x1xf32>,
    %c0_21 = arith.constant 0 : index
    %c0_22 = arith.constant 0 : index
    %40 = vector.load %arg10[%c0_21, %c0_22] : memref<64x1xf32, #tpu.memory_space<vmem>>, vector<64x1xf32>
    %cst_23 = arith.constant 1.000000e+00 : f32
    %cst_24 = arith.constant 0.000000e+00 : f32
    %41 = vector.broadcast %cst_23 : f32 to vector<64x128xf32>
    %42 = vector.broadcast %cst_24 : f32 to vector<64x128xf32>
    %43 = arith.select %25, %41, %42 : vector<64x128xi1>, vector<64x128xf32>
    %cst_25 = arith.constant dense<0.000000e+00> : vector<64xf32>
    %44 = vector.multi_reduction <add>, %43, %cst_25 [1] : vector<64x128xf32> to vector<64xf32>
    %45 = vector.shape_cast %44 : vector<64xf32> to vector<64x1xf32>
    %46 = arith.addf %40, %45 : vector<64x1xf32>
    %c0_26 = arith.constant 0 : index
    %c0_27 = arith.constant 0 : index
    %47 = vector.load %arg10[%c0_26, %c0_27] : memref<64x1xf32, #tpu.memory_space<vmem>>, vector<64x1xf32>
    tpu.vector_store %arg10[%c0_26, %c0_27], %46 {strides = array<i32>} : memref<64x1xf32, #tpu.memory_space<vmem>>, vector<64x1xf32>,
    %c1_i32 = arith.constant 1 : i32
    %48 = arith.cmpi eq, %arg1, %c1_i32 : i32
    %49 = arith.extui %48 : i1 to i32
    %c0_i32_28 = arith.constant 0 : i32
    %50 = arith.cmpi ne, %49, %c0_i32_28 : i32
    scf.if %50 {
      %c0_29 = arith.constant 0 : index
      %c0_30 = arith.constant 0 : index
      %51 = vector.load %arg10[%c0_29, %c0_30] : memref<64x1xf32, #tpu.memory_space<vmem>>, vector<64x1xf32>
      %cst_31 = arith.constant 0.000000e+00 : f32
      %52 = vector.broadcast %cst_31 : f32 to vector<64x1xf32>
      %53 = arith.cmpf ogt, %51, %52 : vector<64x1xf32>
      %c0_32 = arith.constant 0 : index
      %c0_33 = arith.constant 0 : index
      %54 = vector.load %arg9[%c0_32, %c0_33] : memref<64x1xf32, #tpu.memory_space<vmem>>, vector<64x1xf32>
      %c0_34 = arith.constant 0 : index
      %c0_35 = arith.constant 0 : index
      %55 = vector.load %arg8[%c0_34, %c0_35] : memref<64x1xf32, #tpu.memory_space<vmem>>, vector<64x1xf32>
      %56 = math.log %55 : vector<64x1xf32>
      %57 = arith.mulf %51, %56 : vector<64x1xf32>
      %58 = arith.subf %54, %57 : vector<64x1xf32>
      %cst_36 = arith.constant 1.000000e+00 : f32
      %59 = vector.broadcast %cst_36 : f32 to vector<64x1xf32>
      %60 = arith.select %53, %51, %59 : vector<64x1xi1>, vector<64x1xf32>
      %61 = arith.divf %58, %60 : vector<64x1xf32>
      %cst_37 = arith.constant 0.000000e+00 : f32
      %62 = vector.broadcast %cst_37 : f32 to vector<64x1xf32>
      %63 = arith.select %53, %61, %62 : vector<64x1xi1>, vector<64x1xf32>
      %cst_38 = arith.constant 0.000000e+00 : f32
      %64 = vector.broadcast %cst_38 : f32 to vector<64x1xf32>
      %65 = arith.subf %64, %63 : vector<64x1xf32>
      %cst_39 = arith.constant 5.000000e-01 : f32
      %66 = vector.broadcast %cst_39 : f32 to vector<64x1xf32>
      %67 = arith.mulf %65, %66 : vector<64x1xf32>
      %c0_40 = arith.constant 0 : index
      %c0_41 = arith.constant 0 : index
      %68 = vector.load %arg6[%c0_40, %c0_41] : memref<64x1xf32, #tpu.memory_space<vmem>>, vector<64x1xf32>
      tpu.vector_store %arg6[%c0_40, %c0_41], %67 {strides = array<i32>} : memref<64x1xf32, #tpu.memory_space<vmem>>, vector<64x1xf32>,
      %69 = arith.extui %53 : vector<64x1xi1> to vector<64x1xi32>
      %70 = arith.sitofp %69 : vector<64x1xi32> to vector<64x1xf32>
      %c0_42 = arith.constant 0 : index
      %c0_43 = arith.constant 0 : index
      %71 = vector.load %arg7[%c0_42, %c0_43] : memref<64x1xf32, #tpu.memory_space<vmem>>, vector<64x1xf32>
      tpu.vector_store %arg7[%c0_42, %c0_43], %70 {strides = array<i32>} : memref<64x1xf32, #tpu.memory_space<vmem>>, vector<64x1xf32>,
    } else {
    }
    return
  }
  func.func @transform_0(%arg0: i32, %arg1: i32) -> (i32, i32) {
    %c0_i32 = arith.constant 0 : i32
    %c0_i32_0 = arith.constant 0 : i32
    return %arg0, %c0_i32 : i32, i32
  }
  func.func @transform_1(%arg0: i32, %arg1: i32) -> (i32, i32) {
    %c0_i32 = arith.constant 0 : i32
    %c0_i32_0 = arith.constant 0 : i32
    return %arg1, %c0_i32 : i32, i32
  }
  func.func @transform_2(%arg0: i32, %arg1: i32) -> (i32, i32) {
    %c0_i32 = arith.constant 0 : i32
    %c0_i32_0 = arith.constant 0 : i32
    return %arg0, %c0_i32 : i32, i32
  }
  func.func @transform_3(%arg0: i32, %arg1: i32) -> (i32, i32) {
    %c0_i32 = arith.constant 0 : i32
    %c0_i32_0 = arith.constant 0 : i32
    return %c0_i32, %arg1 : i32, i32
  }
  func.func @transform_4(%arg0: i32, %arg1: i32) -> (i32, i32) {
    %c0_i32 = arith.constant 0 : i32
    %c0_i32_0 = arith.constant 0 : i32
    return %arg0, %c0_i32 : i32, i32
  }
  func.func @transform_5(%arg0: i32, %arg1: i32) -> (i32, i32) {
    %c0_i32 = arith.constant 0 : i32
    %c0_i32_0 = arith.constant 0 : i32
    return %arg0, %c0_i32 : i32, i32
  }
}

</mosaic_0001>

<llo_original>
// kernel: tpu_custom_call.1
$region0: #{tpu_custom_call.1}
  #allocation0 [shape = 'u32[]', space=smem, size = 0x4, offset = 0x4, fixed_abs, tag = 'smem constant byte address 0x4 - core index']
  #allocation1 [shape = 'u32[72,128]{1,0:T(1,128)}', space=vmem, size = 0x9000, scoped, tag = 'internal scratch']
  #allocation2 [shape = 'f32[64,1]{1,0:T(8,128)}', space=vmem, size = 0x8000, scoped, tag = 'scratch operand']
  #allocation3 [shape = 'f32[64,1]{1,0:T(8,128)}', space=vmem, size = 0x8000, scoped, tag = 'scratch operand']
  #allocation4 [shape = 'f32[64,1]{1,0:T(8,128)}', space=vmem, size = 0x8000, scoped, tag = 'scratch operand']
  %s0 = inlined_call_operand.vmem [shape: bf16[256,128], index: 0, kind: input, shape index: {}]
  %s1 = inlined_call_operand.vmem [shape: bf16[256,128], index: 1, kind: input, shape index: {}]
  %s2 = inlined_call_operand.vmem [shape: s32[256,1], index: 2, kind: input, shape index: {}]
  %s3 = inlined_call_operand.vmem [shape: s32[1,256], index: 3, kind: input, shape index: {}]
  %s4 = inlined_call_operand.vmem [shape: f32[256,1], index: 4, kind: output, shape index: {0}]
  %s5 = inlined_call_operand.vmem [shape: f32[256,1], index: 5, kind: output, shape index: {1}]
  %6 = xla_tuple %s4, %s5
  %s7 = sld [smem:[#allocation0]]
  $region65: #{tpu_custom_call.1} parent=0
    _
  %s9 = ssub.s32 1, %s7
  %s10 = scalar_select 0, %s9, %s7
  loop: start=0, step=1, limit=10
  $region2: #{tpu_custom_call.1} parent=0 // loop_pre_header
    _
  $region3: #{tpu_custom_call.1} parent=0 // loop_header
    %s12 = sphi 0, %s16
    %p13 = scmp.ge.s32.totalorder %s12, 10
    %s19 = sphi 0, %s31
    %s20 = sphi 0, %s27
    %s21 = sphi 0, %s19
    %s22 = sphi 0, %s20
    %s23 = sphi 0, %s21
    %s24 = sphi 0, %s22
    %s34 = sphi 0, %s36
    %s37 = sphi 0, %s34
    %s38 = sphi 0, %s37
    %s54 = sphi 0, %s38
    %s60 = sphi 0, %s62
    %s63 = sphi 0, %s60
    %s64 = sphi 0, %s63
    %s80 = sphi 0, %s64
    %s86 = sphi 0, %s88
    %s89 = sphi 0, %s86
    %s90 = sphi 0, %s89
    %s106 = sphi 0, %s90
    %s112 = sphi 0, %s114
    %s115 = sphi 0, %s112
    %s116 = sphi 0, %s115
    %s132 = sphi 0, %s116
    %s138 = sphi 0, %s140
    %s141 = sphi 0, %s138
    %s142 = sphi 0, %s141
    %s158 = sphi 0, %s142
    %s164 = sphi 0, %s166
    %s167 = sphi 0, %s164
    %s168 = sphi 0, %s167
    %s184 = sphi 0, %s168
  $region4: #{tpu_custom_call.1} parent=0 // loop_header_branch
    %15 = sbr.rel (%p13) target = $region8
  $region5: #{tpu_custom_call.1} parent=0 // loop_body
    %s17 = ssub.s32 %s12, 1
    %s18 = ssub.s32 %s12, 2
    %s25 = sadd.s32 1, %s20
    %p26 = scmp.ge.s32.totalorder %s25, 2
    %s27 = scalar_select %p26, 0, %s25
    %s28 = sadd.s32 1, %s19
    %s29 = scalar_select %p26, %s28, %s19
    %p30 = scmp.ge.s32.totalorder %s29, 4
    %s31 = scalar_select %p30, 0, %s29
    %s32 = ssub.s32 %s19, %s31
    %p33 = scmp.eq.s32.totalorder %s32, 0
    %s35 = sadd.s32 %s34, 1
    %s36 = scalar_select %p33, %s34, %s35
    %p39 = pneg %p33
    %p40 = scmp.eq.s32.totalorder %s12, 7
    %p41 = por %p39, %p40
    %p42 = scmp.ne.s32.totalorder %s34, %s37
    %p43 = scmp.eq.s32.totalorder %s12, 0
    %p44 = por %p42, %p43
    %p45 = scmp.ne.s32.totalorder %s34, %s37
    %p46 = scmp.eq.s32.totalorder %s17, 7
    %p47 = por %p45, %p46
    %p48 = scmp.ne.s32.totalorder %s37, %s38
    %p49 = scmp.eq.s32.totalorder %s17, 0
    %p50 = por %p48, %p49
    %p51 = scmp.ne.s32.totalorder %s37, %s38
    %p52 = scmp.eq.s32.totalorder %s18, 7
    %p53 = por %p51, %p52
    %p55 = scmp.ne.s32.totalorder %s38, %s54
    %p56 = scmp.eq.s32.totalorder %s18, 0
    %p57 = por %p55, %p56
    %s58 = ssub.s32 %s20, %s27
    %p59 = scmp.eq.s32.totalorder %s58, 0
    %s61 = sadd.s32 %s60, 1
    %s62 = scalar_select %p59, %s60, %s61
    %p65 = pneg %p59
    %p66 = scmp.eq.s32.totalorder %s12, 7
    %p67 = por %p65, %p66
    %p68 = scmp.ne.s32.totalorder %s60, %s63
    %p69 = scmp.eq.s32.totalorder %s12, 0
    %p70 = por %p68, %p69
    %p71 = scmp.ne.s32.totalorder %s60, %s63
    %p72 = scmp.eq.s32.totalorder %s17, 7
    %p73 = por %p71, %p72
    %p74 = scmp.ne.s32.totalorder %s63, %s64
    %p75 = scmp.eq.s32.totalorder %s17, 0
    %p76 = por %p74, %p75
    %p77 = scmp.ne.s32.totalorder %s63, %s64
    %p78 = scmp.eq.s32.totalorder %s18, 7
    %p79 = por %p77, %p78
    %p81 = scmp.ne.s32.totalorder %s64, %s80
    %p82 = scmp.eq.s32.totalorder %s18, 0
    %p83 = por %p81, %p82
    %s84 = ssub.s32 %s19, %s31
    %p85 = scmp.eq.s32.totalorder %s84, 0
    %s87 = sadd.s32 %s86, 1
    %s88 = scalar_select %p85, %s86, %s87
    %p91 = pneg %p85
    %p92 = scmp.eq.s32.totalorder %s12, 7
    %p93 = por %p91, %p92
    %p94 = scmp.ne.s32.totalorder %s86, %s89
    %p95 = scmp.eq.s32.totalorder %s12, 0
    %p96 = por %p94, %p95
    %p97 = scmp.ne.s32.totalorder %s86, %s89
    %p98 = scmp.eq.s32.totalorder %s17, 7
    %p99 = por %p97, %p98
    %p100 = scmp.ne.s32.totalorder %s89, %s90
    %p101 = scmp.eq.s32.totalorder %s17, 0
    %p102 = por %p100, %p101
    %p103 = scmp.ne.s32.totalorder %s89, %s90
    %p104 = scmp.eq.s32.totalorder %s18, 7
    %p105 = por %p103, %p104
    %p107 = scmp.ne.s32.totalorder %s90, %s106
    %p108 = scmp.eq.s32.totalorder %s18, 0
    %p109 = por %p107, %p108
    %s110 = ssub.s32 %s20, %s27
    %p111 = scmp.eq.s32.totalorder %s110, 0
    %s113 = sadd.s32 %s112, 1
    %s114 = scalar_select %p111, %s112, %s113
    %p117 = pneg %p111
    %p118 = scmp.eq.s32.totalorder %s12, 7
    %p119 = por %p117, %p118
    %p120 = scmp.ne.s32.totalorder %s112, %s115
    %p121 = scmp.eq.s32.totalorder %s12, 0
    %p122 = por %p120, %p121
    %p123 = scmp.ne.s32.totalorder %s112, %s115
    %p124 = scmp.eq.s32.totalorder %s17, 7
    %p125 = por %p123, %p124
    %p126 = scmp.ne.s32.totalorder %s115, %s116
    %p127 = scmp.eq.s32.totalorder %s17, 0
    %p128 = por %p126, %p127
    %p129 = scmp.ne.s32.totalorder %s115, %s116
    %p130 = scmp.eq.s32.totalorder %s18, 7
    %p131 = por %p129, %p130
    %p133 = scmp.ne.s32.totalorder %s116, %s132
    %p134 = scmp.eq.s32.totalorder %s18, 0
    %p135 = por %p133, %p134
    %s136 = ssub.s32 %s19, %s31
    %p137 = scmp.eq.s32.totalorder %s136, 0
    %s139 = sadd.s32 %s138, 1
    %s140 = scalar_select %p137, %s138, %s139
    %p143 = pneg %p137
    %p144 = scmp.eq.s32.totalorder %s12, 7
    %p145 = por %p143, %p144
    %p146 = scmp.ne.s32.totalorder %s138, %s141
    %p147 = scmp.eq.s32.totalorder %s12, 0
    %p148 = por %p146, %p147
    %p149 = scmp.ne.s32.totalorder %s138, %s141
    %p150 = scmp.eq.s32.totalorder %s17, 7
    %p151 = por %p149, %p150
    %p152 = scmp.ne.s32.totalorder %s141, %s142
    %p153 = scmp.eq.s32.totalorder %s17, 0
    %p154 = por %p152, %p153
    %p155 = scmp.ne.s32.totalorder %s141, %s142
    %p156 = scmp.eq.s32.totalorder %s18, 7
    %p157 = por %p155, %p156
    %p159 = scmp.ne.s32.totalorder %s142, %s158
    %p160 = scmp.eq.s32.totalorder %s18, 0
    %p161 = por %p159, %p160
    %s162 = ssub.s32 %s19, %s31
    %p163 = scmp.eq.s32.totalorder %s162, 0
    %s165 = sadd.s32 %s164, 1
    %s166 = scalar_select %p163, %s164, %s165
    %p169 = pneg %p163
    %p170 = scmp.eq.s32.totalorder %s12, 7
    %p171 = por %p169, %p170
    %p172 = scmp.ne.s32.totalorder %s164, %s167
    %p173 = scmp.eq.s32.totalorder %s12, 0
    %p174 = por %p172, %p173
    %p175 = scmp.ne.s32.totalorder %s164, %s167
    %p176 = scmp.eq.s32.totalorder %s17, 7
    %p177 = por %p175, %p176
    %p178 = scmp.ne.s32.totalorder %s167, %s168
    %p179 = scmp.eq.s32.totalorder %s17, 0
    %p180 = por %p178, %p179
    %p181 = scmp.ne.s32.totalorder %s167, %s168
    %p182 = scmp.eq.s32.totalorder %s18, 7
    %p183 = por %p181, %p182
    %p185 = scmp.ne.s32.totalorder %s168, %s184
    %p186 = scmp.eq.s32.totalorder %s18, 0
    %p187 = por %p185, %p186
    %p188 = scmp.le.s32.totalorder 1, %s12
    %p189 = scmp.lt.s32.totalorder %s12, 9
    %p190 = pnand %p188, %p189
    %p191 = pneg %p190
    // Predicated region
    $region9: #{tpu_custom_call.1} parent=5 // pred_check
      _
    $region10: #{tpu_custom_call.1} parent=5 // pred_check_branch
      %193 = sbr.rel (%p190) target = $region12
    $region11: #{tpu_custom_call.1} parent=5 // pred_region
      %s194 = ssub.s32 %s12, 1
    $region12: #{tpu_custom_call.1} parent=5 // pred_fallthru
      _
    %p195 = scmp.lt.s32.totalorder %s12, 8
    // Predicated region
    $region13: #{tpu_custom_call.1} parent=5 // pred_check
      %p196 = pneg %p195
    $region14: #{tpu_custom_call.1} parent=5 // pred_check_branch
      %198 = sbr.rel (%p196) target = $region16
    $region15: #{tpu_custom_call.1} parent=5 // pred_region
      // Predicated region
      $region17: #{tpu_custom_call.1} parent=15 // pred_check
        %p199 = pneg %p44
      $region18: #{tpu_custom_call.1} parent=15 // pred_check_branch
        %201 = sbr.rel (%p199) target = $region20
      $region19: #{tpu_custom_call.1} parent=15 // pred_region
        %s202 = smul.u32 8, %s19
        %p203 = scmp.lt.s32.totalorder %s202, 31
        %s204 = scalar_select %p203, %s202, 31
        %s205 = smul.addr %s204, 4
        %s206 = scalar_lea.vmem %s0, %s205
        %s207 = smul.u32 8, %s19
      $region20: #{tpu_custom_call.1} parent=15 // pred_fallthru
        _
      // Predicated region
      $region21: #{tpu_custom_call.1} parent=15 // pred_check
        %p208 = pneg %p70
      $region22: #{tpu_custom_call.1} parent=15 // pred_check_branch
        %210 = sbr.rel (%p208) target = $region24
      $region23: #{tpu_custom_call.1} parent=15 // pred_region
        %s211 = smul.u32 16, %s20
        %p212 = scmp.lt.s32.totalorder %s211, 31
        %s213 = scalar_select %p212, %s211, 31
        %s214 = smul.addr %s213, 4
        %s215 = scalar_lea.vmem %s1, %s214
        %s216 = smul.u32 16, %s20
      $region24: #{tpu_custom_call.1} parent=15 // pred_fallthru
        _
      // Predicated region
      $region25: #{tpu_custom_call.1} parent=15 // pred_check
        %p217 = pneg %p96
      $region26: #{tpu_custom_call.1} parent=15 // pred_check_branch
        %219 = sbr.rel (%p217) target = $region28
      $region27: #{tpu_custom_call.1} parent=15 // pred_region
        %s220 = smul.u32 8, %s19
        %p221 = scmp.lt.s32.totalorder %s220, 31
        %s222 = scalar_select %p221, %s220, 31
        %s223 = smul.addr %s222, 8
        %s224 = scalar_lea.vmem %s2, %s223
        %s225 = smul.u32 8, %s19
      $region28: #{tpu_custom_call.1} parent=15 // pred_fallthru
        _
      // Predicated region
      $region29: #{tpu_custom_call.1} parent=15 // pred_check
        %p226 = pneg %p122
      $region30: #{tpu_custom_call.1} parent=15 // pred_check_branch
        %228 = sbr.rel (%p226) target = $region32
      $region31: #{tpu_custom_call.1} parent=15 // pred_region
        %p229 = scmp.lt.s32.totalorder %s20, 1
        %s230 = scalar_select %p229, %s20, 1
        %s231 = scalar_lea.vmem %s3, %s230
      $region32: #{tpu_custom_call.1} parent=15 // pred_fallthru
        _
    $region16: #{tpu_custom_call.1} parent=5 // pred_fallthru
      _
    %p232 = scmp.le.s32.totalorder 1, %s12
    %p233 = scmp.lt.s32.totalorder %s12, 9
    %p234 = pnand %p232, %p233
    %p235 = pneg %p234
    // Predicated region
    $region33: #{tpu_custom_call.1} parent=5 // pred_check
      _
    $region34: #{tpu_custom_call.1} parent=5 // pred_check_branch
      %237 = sbr.rel (%p234) target = $region36
    $region35: #{tpu_custom_call.1} parent=5 // pred_region
      %s238 = ssub.s32 %s12, 1
      %s239 = smul.u32 8, %s21
      %p240 = scmp.lt.s32.totalorder %s239, 31
      %s241 = scalar_select %p240, %s239, 31
      %s242 = smul.addr %s241, 4
      %s243 = scalar_lea.vmem %s0, %s242
      %p244 = pneg %p50
      %p245 = pneg %p47
      %s246 = smul.u32 16, %s22
      %p247 = scmp.lt.s32.totalorder %s246, 31
      %s248 = scalar_select %p247, %s246, 31
      %s249 = smul.addr %s248, 4
      %s250 = scalar_lea.vmem %s1, %s249
      %p251 = pneg %p76
      %p252 = pneg %p73
      %s253 = smul.u32 8, %s21
      %p254 = scmp.lt.s32.totalorder %s253, 31
      %s255 = scalar_select %p254, %s253, 31
      %s256 = smul.addr %s255, 8
      %s257 = scalar_lea.vmem %s2, %s256
      %p258 = pneg %p102
      %p259 = pneg %p99
      %p260 = scmp.lt.s32.totalorder %s22, 1
      %s261 = scalar_select %p260, %s22, 1
      %s262 = scalar_lea.vmem %s3, %s261
      %p263 = pneg %p128
      %p264 = pneg %p125
      %p265 = pneg %p154
      %p266 = pneg %p151
      %s267 = smul.u32 8, %s21
      %p268 = scmp.lt.s32.totalorder %s267, 31
      %s269 = scalar_select %p268, %s267, 31
      %s270 = smul.addr %s269, 8
      %s271 = scalar_lea.vmem %s4, %s270
      %p272 = pneg %p180
      %p273 = pneg %p177
      %s274 = smul.u32 8, %s21
      %p275 = scmp.lt.s32.totalorder %s274, 31
      %s276 = scalar_select %p275, %s274, 31
      %s277 = smul.addr %s276, 8
      %s278 = scalar_lea.vmem %s5, %s277
      %s279 = smul.u32 8, %s21
      %p280 = scmp.lt.s32.totalorder %s279, 31
      %s281 = scalar_select %p280, %s279, 31
      %s282 = smul.addr %s281, 4
      %s283 = scalar_lea.vmem %s0, %s282
      %s284 = smul.u32 8, %s21
      %s285 = smul.u32 16, %s22
      %p286 = scmp.lt.s32.totalorder %s285, 31
      %s287 = scalar_select %p286, %s285, 31
      %s288 = smul.addr %s287, 4
      %s289 = scalar_lea.vmem %s1, %s288
      %s290 = smul.u32 16, %s22
      %s291 = smul.u32 8, %s21
      %p292 = scmp.lt.s32.totalorder %s291, 31
      %s293 = scalar_select %p292, %s291, 31
      %s294 = smul.addr %s293, 8
      %s295 = scalar_lea.vmem %s2, %s294
      %s296 = smul.u32 8, %s21
      %p297 = scmp.lt.s32.totalorder %s22, 1
      %s298 = scalar_select %p297, %s22, 1
      %s299 = scalar_lea.vmem %s3, %s298
      %s300 = smul.u32 8, %s21
      %p301 = scmp.lt.s32.totalorder %s300, 31
      %s302 = scalar_select %p301, %s300, 31
      %s303 = smul.addr %s302, 8
      %s304 = scalar_lea.vmem %s4, %s303
      %s305 = smul.u32 8, %s21
      %s306 = smul.u32 8, %s21
      %p307 = scmp.lt.s32.totalorder %s306, 31
      %s308 = scalar_select %p307, %s306, 31
      %s309 = smul.addr %s308, 8
      %s310 = scalar_lea.vmem %s5, %s309
      %s311 = smul.u32 8, %s21
      %p312 = scmp.eq.s32.totalorder %s22, 0
      // Predicated region
      $region37: #{tpu_custom_call.1} parent=35 // pred_check
        %p313 = pneg %p312
      $region38: #{tpu_custom_call.1} parent=35 // pred_check_branch
        %315 = sbr.rel (%p313) target = $region40
      $region39: #{tpu_custom_call.1} parent=35 // pred_region
        %vm316 = vcmask 7168
        %317 = vst.msk [vmem:[#allocation2] sm:$0xff] %vm316, 0.0
        %318 = vst.msk [vmem:[#allocation2 + $0x8] sm:$0xff] %vm316, 0.0
        %319 = vst.msk [vmem:[#allocation2 + $0x10] sm:$0xff] %vm316, 0.0
        %320 = vst.msk [vmem:[#allocation2 + $0x18] sm:$0xff] %vm316, 0.0
        %321 = vst.msk [vmem:[#allocation2 + $0x20] sm:$0xff] %vm316, 0.0
        %322 = vst.msk [vmem:[#allocation2 + $0x28] sm:$0xff] %vm316, 0.0
        %323 = vst.msk [vmem:[#allocation2 + $0x30] sm:$0xff] %vm316, 0.0
        %324 = vst.msk [vmem:[#allocation2 + $0x38] sm:$0xff] %vm316, 0.0
        %325 = vst.msk [vmem:[#allocation3] sm:$0xff] %vm316, 0.0
        %326 = vst.msk [vmem:[#allocation3 + $0x8] sm:$0xff] %vm316, 0.0
        %327 = vst.msk [vmem:[#allocation3 + $0x10] sm:$0xff] %vm316, 0.0
        %328 = vst.msk [vmem:[#allocation3 + $0x18] sm:$0xff] %vm316, 0.0
        %329 = vst.msk [vmem:[#allocation3 + $0x20] sm:$0xff] %vm316, 0.0
        %330 = vst.msk [vmem:[#allocation3 + $0x28] sm:$0xff] %vm316, 0.0
        %331 = vst.msk [vmem:[#allocation3 + $0x30] sm:$0xff] %vm316, 0.0
        %332 = vst.msk [vmem:[#allocation3 + $0x38] sm:$0xff] %vm316, 0.0
        %333 = vst.msk [vmem:[#allocation4] sm:$0xff] %vm316, 0.0
        %334 = vst.msk [vmem:[#allocation4 + $0x8] sm:$0xff] %vm316, 0.0
        %335 = vst.msk [vmem:[#allocation4 + $0x10] sm:$0xff] %vm316, 0.0
        %336 = vst.msk [vmem:[#allocation4 + $0x18] sm:$0xff] %vm316, 0.0
        %337 = vst.msk [vmem:[#allocation4 + $0x20] sm:$0xff] %vm316, 0.0
        %338 = vst.msk [vmem:[#allocation4 + $0x28] sm:$0xff] %vm316, 0.0
        %339 = vst.msk [vmem:[#allocation4 + $0x30] sm:$0xff] %vm316, 0.0
        %340 = vst.msk [vmem:[#allocation4 + $0x38] sm:$0xff] %vm316, 0.0
      $region40: #{tpu_custom_call.1} parent=35 // pred_fallthru
        _
      %v341 = vld [vmem:[%s283] sm:$0xf]
      %v342 = vld [vmem:[%s283 + $0x4] sm:$0xf]
      %v343 = vld [vmem:[%s283 + $0x8] sm:$0xf]
      %v344 = vld [vmem:[%s283 + $0xc] sm:$0xf]
      %v345 = vld [vmem:[%s283 + $0x10] sm:$0xf]
      %v346 = vld [vmem:[%s283 + $0x14] sm:$0xf]
      %v347 = vld [vmem:[%s283 + $0x18] sm:$0xf]
      %v348 = vld [vmem:[%s283 + $0x1c] sm:$0xf]
      %v349 = vld [vmem:[%s289] sm:$0xf]
      %v350 = vld [vmem:[%s289 + $0x4] sm:$0xf]
      %v351 = vld [vmem:[%s289 + $0x8] sm:$0xf]
      %v352 = vld [vmem:[%s289 + $0xc] sm:$0xf]
      %v353 = vld [vmem:[%s289 + $0x10] sm:$0xf]
      %v354 = vld [vmem:[%s289 + $0x14] sm:$0xf]
      %v355 = vld [vmem:[%s289 + $0x18] sm:$0xf]
      %v356 = vld [vmem:[%s289 + $0x1c] sm:$0xf]
      %v357 = vld [vmem:[%s289 + $0x20] sm:$0xf]
      %v358 = vld [vmem:[%s289 + $0x24] sm:$0xf]
      %v359 = vld [vmem:[%s289 + $0x28] sm:$0xf]
      %v360 = vld [vmem:[%s289 + $0x2c] sm:$0xf]
      %v361 = vld [vmem:[%s289 + $0x30] sm:$0xf]
      %v362 = vld [vmem:[%s289 + $0x34] sm:$0xf]
      %v363 = vld [vmem:[%s289 + $0x38] sm:$0xf]
      %v364 = vld [vmem:[%s289 + $0x3c] sm:$0xf]
      %v373 = vunpack.c.l.b16 %v341
      %v374 = vunpack.c.l.b16 %v342
      %v375 = vunpack.c.l.b16 %v343
      %v376 = vunpack.c.l.b16 %v344
      %v377 = vunpack.c.l.b16 %v345
      %v378 = vunpack.c.l.b16 %v346
      %v379 = vunpack.c.l.b16 %v347
      %v380 = vunpack.c.l.b16 %v348
      %v381 = vpack.c.b16 %v374, %v373
      %v382 = vpack.c.b16 %v376, %v375
      %v383 = vpack.c.b16 %v378, %v377
      %v384 = vpack.c.b16 %v380, %v379
      %v405 = vunpack.c.l.b16 %v349
      %v406 = vunpack.c.l.b16 %v350
      %v407 = vunpack.c.l.b16 %v351
      %v408 = vunpack.c.l.b16 %v352
      %v409 = vunpack.c.l.b16 %v353
      %v410 = vunpack.c.l.b16 %v354
      %v411 = vunpack.c.l.b16 %v355
      %v412 = vunpack.c.l.b16 %v356
      %v413 = vunpack.c.l.b16 %v357
      %v414 = vunpack.c.l.b16 %v358
      %v415 = vunpack.c.l.b16 %v359
      %v416 = vunpack.c.l.b16 %v360
      %v417 = vunpack.c.l.b16 %v361
      %v418 = vunpack.c.l.b16 %v362
      %v419 = vunpack.c.l.b16 %v363
      %v420 = vunpack.c.l.b16 %v364
      %v421 = vpack.c.b16 %v406, %v405
      %v422 = vpack.c.b16 %v408, %v407
      %v423 = vpack.c.b16 %v410, %v409
      %v424 = vpack.c.b16 %v412, %v411
      %v425 = vpack.c.b16 %v414, %v413
      %v426 = vpack.c.b16 %v416, %v415
      %v427 = vpack.c.b16 %v418, %v417
      %v428 = vpack.c.b16 %v420, %v419
      %437 = vmatpush.bf16.xpose.msra.mxu0 %v428
      %438 = vmatpush.bf16.xpose.msra.mxu0 %v427
      %439 = vmatpush.bf16.xpose.msra.mxu0 %v426
      %440 = vmatpush.bf16.xpose.msra.mxu0 %v425
      %441 = vmatpush.bf16.xpose.msra.mxu0 %v424
      %442 = vmatpush.bf16.xpose.msra.mxu0 %v423
      %443 = vmatpush.bf16.xpose.msra.mxu0 %v422
      %444 = vmatpush.bf16.xpose.msra.mxu0 %v421
      %445 = vmatmul.bf16.gmra.mxu0 %v381
      %v446 = vpop.f32.mrf.mxu0
      %v447 = vadd.f32 0.0, %v446
      %v448 = vpop.f32.mrf.mxu0
      %v449 = vadd.f32 0.0, %v448
      %450 = vmatmul.bf16.gmra.mxu0 %v382
      %v451 = vpop.f32.mrf.mxu0
      %v452 = vadd.f32 0.0, %v451
      %v453 = vpop.f32.mrf.mxu0
      %v454 = vadd.f32 0.0, %v453
      %455 = vmatmul.bf16.gmra.mxu0 %v383
      %v456 = vpop.f32.mrf.mxu0
      %v457 = vadd.f32 0.0, %v456
      %v458 = vpop.f32.mrf.mxu0
      %v459 = vadd.f32 0.0, %v458
      %460 = vmatmul.bf16.gmra.mxu0 %v384
      %v461 = vpop.f32.mrf.mxu0
      %v462 = vadd.f32 0.0, %v461
      %v463 = vpop.f32.mrf.mxu0
      %v464 = vadd.f32 0.0, %v463
      %465 = vdwg.mxu0
      %v466 = vsub.f32 %v447, 2.0
      %v467 = vsub.f32 %v449, 2.0
      %v468 = vsub.f32 %v452, 2.0
      %v469 = vsub.f32 %v454, 2.0
      %v470 = vsub.f32 %v457, 2.0
      %v471 = vsub.f32 %v459, 2.0
      %v472 = vsub.f32 %v462, 2.0
      %v473 = vsub.f32 %v464, 2.0
      %v474 = vmul.f32 %v466, 1.442695
      %v475 = vpow.pop %v474
      %v476 = vmul.f32 %v467, 1.442695
      %v477 = vpow.pop %v476
      %v478 = vmul.f32 %v468, 1.442695
      %v479 = vpow.pop %v478
      %v480 = vmul.f32 %v469, 1.442695
      %v481 = vpow.pop %v480
      %v482 = vmul.f32 %v470, 1.442695
      %v483 = vpow.pop %v482
      %v484 = vmul.f32 %v471, 1.442695
      %v485 = vpow.pop %v484
      %v486 = vmul.f32 %v472, 1.442695
      %v487 = vpow.pop %v486
      %v488 = vmul.f32 %v473, 1.442695
      %v489 = vpow.pop %v488
      %v490 = vld [vmem:[%s295] sm:$0xff]
      %v491 = vld [vmem:[%s295 + $0x8] sm:$0xff]
      %v492 = vld [vmem:[%s295 + $0x10] sm:$0xff]
      %v493 = vld [vmem:[%s295 + $0x18] sm:$0xff]
      %v494 = vld [vmem:[%s295 + $0x20] sm:$0xff]
      %v495 = vld [vmem:[%s295 + $0x28] sm:$0xff]
      %v496 = vld [vmem:[%s295 + $0x30] sm:$0xff]
      %v497 = vld [vmem:[%s295 + $0x38] sm:$0xff]
      %v498 = vld [vmem:[%s299] sm:$0x1]
      %499 = vset.pattern.permute.xlu0 0
      %500 = vperm.xlu0 %499, %v490
      %v501 = vpop.permute.xlu0 %500
      %502 = vset.pattern.permute.xlu0 0
      %503 = vperm.xlu0 %502, %v491
      %v504 = vpop.permute.xlu0 %503
      %505 = vset.pattern.permute.xlu0 0
      %506 = vperm.xlu0 %505, %v492
      %v507 = vpop.permute.xlu0 %506
      %508 = vset.pattern.permute.xlu0 0
      %509 = vperm.xlu0 %508, %v493
      %v510 = vpop.permute.xlu0 %509
      %511 = vset.pattern.permute.xlu0 0
      %512 = vperm.xlu0 %511, %v494
      %v513 = vpop.permute.xlu0 %512
      %514 = vset.pattern.permute.xlu0 0
      %515 = vperm.xlu0 %514, %v495
      %v516 = vpop.permute.xlu0 %515
      %517 = vset.pattern.permute.xlu0 0
      %518 = vperm.xlu0 %517, %v496
      %v519 = vpop.permute.xlu0 %518
      %520 = vset.pattern.permute.xlu0 0
      %521 = vperm.xlu0 %520, %v497
      %v522 = vpop.permute.xlu0 %521
      %v523 = vperm.slane %v498, 0
      %vm524 = vcmp.eq.s32.totalorder %v501, %v523
      %vm525 = vcmp.eq.s32.totalorder %v504, %v523
      %vm526 = vcmp.eq.s32.totalorder %v507, %v523
      %vm527 = vcmp.eq.s32.totalorder %v510, %v523
      %vm528 = vcmp.eq.s32.totalorder %v513, %v523
      %vm529 = vcmp.eq.s32.totalorder %v516, %v523
      %vm530 = vcmp.eq.s32.totalorder %v519, %v523
      %vm531 = vcmp.eq.s32.totalorder %v522, %v523
      %s532 = smul.u32 %s21, 64
      %v533 = vlaneseq
      %v534 = vshrl.u32 %v533, 7
      %v535 = vadd.s32 %v534, 8
      %v536 = vadd.s32 %v534, 16
      %v537 = vadd.s32 %v534, 24
      %v538 = vadd.s32 %v534, 32
      %v539 = vadd.s32 %v534, 40
      %v540 = vadd.s32 %v534, 48
      %v541 = vadd.s32 %v534, 56
      %v542 = vstv %s532
      %v543 = vadd.s32 %v542, %v534
      %v544 = vadd.s32 %v542, %v535
      %v545 = vadd.s32 %v542, %v536
      %v546 = vadd.s32 %v542, %v537
      %v547 = vadd.s32 %v542, %v538
      %v548 = vadd.s32 %v542, %v539
      %v549 = vadd.s32 %v542, %v540
      %v550 = vadd.s32 %v542, %v541
      %s551 = smul.u32 %s22, 128
      %v552 = vlaneseq
      %v553 = vand.u32 %v552, 127
      %v554 = vstv %s551
      %v555 = vadd.s32 %v554, %v553
      %vm556 = vcmp.ne.s32.totalorder %v543, %v555
      %vm557 = vcmp.ne.s32.totalorder %v544, %v555
      %vm558 = vcmp.ne.s32.totalorder %v545, %v555
      %vm559 = vcmp.ne.s32.totalorder %v546, %v555
      %vm560 = vcmp.ne.s32.totalorder %v547, %v555
      %vm561 = vcmp.ne.s32.totalorder %v548, %v555
      %vm562 = vcmp.ne.s32.totalorder %v549, %v555
      %vm563 = vcmp.ne.s32.totalorder %v550, %v555
      %vm564 = vmand %vm524, %vm556
      %vm565 = vmand %vm525, %vm557
      %vm566 = vmand %vm526, %vm558
      %vm567 = vmand %vm527, %vm559
      %vm568 = vmand %vm528, %vm560
      %vm569 = vmand %vm529, %vm561
      %vm570 = vmand %vm530, %vm562
      %vm571 = vmand %vm531, %vm563
      %v572 = vld [vmem:[#allocation2] sm:$0xff]
      %v573 = vld [vmem:[#allocation2 + $0x8] sm:$0xff]
      %v574 = vld [vmem:[#allocation2 + $0x10] sm:$0xff]
      %v575 = vld [vmem:[#allocation2 + $0x18] sm:$0xff]
      %v576 = vld [vmem:[#allocation2 + $0x20] sm:$0xff]
      %v577 = vld [vmem:[#allocation2 + $0x28] sm:$0xff]
      %v578 = vld [vmem:[#allocation2 + $0x30] sm:$0xff]
      %v579 = vld [vmem:[#allocation2 + $0x38] sm:$0xff]
      %v580 = vsel %vm556, %v475, 0.0
      %v581 = vsel %vm557, %v477, 0.0
      %v582 = vsel %vm558, %v479, 0.0
      %v583 = vsel %vm559, %v481, 0.0
      %v584 = vsel %vm560, %v483, 0.0
      %v585 = vsel %vm561, %v485, 0.0
      %v586 = vsel %vm562, %v487, 0.0
      %v587 = vsel %vm563, %v489, 0.0
      %588 = vadd.xlane.f32.xlu0 %v580
      %v589 = vpop.xlane.xlu0 %588
      %590 = vadd.xlane.f32.xlu0 %v581
      %v591 = vpop.xlane.xlu0 %590
      %592 = vadd.xlane.f32.xlu0 %v582
      %v593 = vpop.xlane.xlu0 %592
      %594 = vadd.xlane.f32.xlu0 %v583
      %v595 = vpop.xlane.xlu0 %594
      %596 = vadd.xlane.f32.xlu0 %v584
      %v597 = vpop.xlane.xlu0 %596
      %598 = vadd.xlane.f32.xlu0 %v585
      %v599 = vpop.xlane.xlu0 %598
      %600 = vadd.xlane.f32.xlu0 %v586
      %v601 = vpop.xlane.xlu0 %600
      %602 = vadd.xlane.f32.xlu0 %v587
      %v603 = vpop.xlane.xlu0 %602
      %v604 = vadd.f32 %v572, %v589
      %v605 = vadd.f32 %v573, %v591
      %v606 = vadd.f32 %v574, %v593
      %v607 = vadd.f32 %v575, %v595
      %v608 = vadd.f32 %v576, %v597
      %v609 = vadd.f32 %v577, %v599
      %v610 = vadd.f32 %v578, %v601
      %v611 = vadd.f32 %v579, %v603
      %vm612 = vcmask 7168
      %613 = vst.msk [vmem:[#allocation2] sm:$0xff] %vm612, %v604
      %614 = vst.msk [vmem:[#allocation2 + $0x8] sm:$0xff] %vm612, %v605
      %615 = vst.msk [vmem:[#allocation2 + $0x10] sm:$0xff] %vm612, %v606
      %616 = vst.msk [vmem:[#allocation2 + $0x18] sm:$0xff] %vm612, %v607
      %617 = vst.msk [vmem:[#allocation2 + $0x20] sm:$0xff] %vm612, %v608
      %618 = vst.msk [vmem:[#allocation2 + $0x28] sm:$0xff] %vm612, %v609
      %619 = vst.msk [vmem:[#allocation2 + $0x30] sm:$0xff] %vm612, %v610
      %620 = vst.msk [vmem:[#allocation2 + $0x38] sm:$0xff] %vm612, %v611
      %v621 = vld [vmem:[#allocation3] sm:$0xff]
      %v622 = vld [vmem:[#allocation3 + $0x8] sm:$0xff]
      %v623 = vld [vmem:[#allocation3 + $0x10] sm:$0xff]
      %v624 = vld [vmem:[#allocation3 + $0x18] sm:$0xff]
      %v625 = vld [vmem:[#allocation3 + $0x20] sm:$0xff]
      %v626 = vld [vmem:[#allocation3 + $0x28] sm:$0xff]
      %v627 = vld [vmem:[#allocation3 + $0x30] sm:$0xff]
      %v628 = vld [vmem:[#allocation3 + $0x38] sm:$0xff]
      %v629 = vsel %vm564, %v466, 0.0
      %v630 = vsel %vm565, %v467, 0.0
      %v631 = vsel %vm566, %v468, 0.0
      %v632 = vsel %vm567, %v469, 0.0
      %v633 = vsel %vm568, %v470, 0.0
      %v634 = vsel %vm569, %v471, 0.0
      %v635 = vsel %vm570, %v472, 0.0
      %v636 = vsel %vm571, %v473, 0.0
      %637 = vadd.xlane.f32.xlu0 %v629
      %v638 = vpop.xlane.xlu0 %637
      %639 = vadd.xlane.f32.xlu0 %v630
      %v640 = vpop.xlane.xlu0 %639
      %641 = vadd.xlane.f32.xlu0 %v631
      %v642 = vpop.xlane.xlu0 %641
      %643 = vadd.xlane.f32.xlu0 %v632
      %v644 = vpop.xlane.xlu0 %643
      %645 = vadd.xlane.f32.xlu0 %v633
      %v646 = vpop.xlane.xlu0 %645
      %647 = vadd.xlane.f32.xlu0 %v634
      %v648 = vpop.xlane.xlu0 %647
      %649 = vadd.xlane.f32.xlu0 %v635
      %v650 = vpop.xlane.xlu0 %649
      %651 = vadd.xlane.f32.xlu0 %v636
      %v652 = vpop.xlane.xlu0 %651
      %v653 = vadd.f32 %v621, %v638
      %v654 = vadd.f32 %v622, %v640
      %v655 = vadd.f32 %v623, %v642
      %v656 = vadd.f32 %v624, %v644
      %v657 = vadd.f32 %v625, %v646
      %v658 = vadd.f32 %v626, %v648
      %v659 = vadd.f32 %v627, %v650
      %v660 = vadd.f32 %v628, %v652
      %661 = vst.msk [vmem:[#allocation3] sm:$0xff] %vm612, %v653
      %662 = vst.msk [vmem:[#allocation3 + $0x8] sm:$0xff] %vm612, %v654
      %663 = vst.msk [vmem:[#allocation3 + $0x10] sm:$0xff] %vm612, %v655
      %664 = vst.msk [vmem:[#allocation3 + $0x18] sm:$0xff] %vm612, %v656
      %665 = vst.msk [vmem:[#allocation3 + $0x20] sm:$0xff] %vm612, %v657
      %666 = vst.msk [vmem:[#allocation3 + $0x28] sm:$0xff] %vm612, %v658
      %667 = vst.msk [vmem:[#allocation3 + $0x30] sm:$0xff] %vm612, %v659
      %668 = vst.msk [vmem:[#allocation3 + $0x38] sm:$0xff] %vm612, %v660
      %v669 = vld [vmem:[#allocation4] sm:$0xff]
      %v670 = vld [vmem:[#allocation4 + $0x8] sm:$0xff]
      %v671 = vld [vmem:[#allocation4 + $0x10] sm:$0xff]
      %v672 = vld [vmem:[#allocation4 + $0x18] sm:$0xff]
      %v673 = vld [vmem:[#allocation4 + $0x20] sm:$0xff]
      %v674 = vld [vmem:[#allocation4 + $0x28] sm:$0xff]
      %v675 = vld [vmem:[#allocation4 + $0x30] sm:$0xff]
      %v676 = vld [vmem:[#allocation4 + $0x38] sm:$0xff]
      %v677 = vsel %vm564, 1.0, 0.0
      %v678 = vsel %vm565, 1.0, 0.0
      %v679 = vsel %vm566, 1.0, 0.0
      %v680 = vsel %vm567, 1.0, 0.0
      %v681 = vsel %vm568, 1.0, 0.0
      %v682 = vsel %vm569, 1.0, 0.0
      %v683 = vsel %vm570, 1.0, 0.0
      %v684 = vsel %vm571, 1.0, 0.0
      %685 = vadd.xlane.f32.xlu0 %v677
      %v686 = vpop.xlane.xlu0 %685
      %687 = vadd.xlane.f32.xlu0 %v678
      %v688 = vpop.xlane.xlu0 %687
      %689 = vadd.xlane.f32.xlu0 %v679
      %v690 = vpop.xlane.xlu0 %689
      %691 = vadd.xlane.f32.xlu0 %v680
      %v692 = vpop.xlane.xlu0 %691
      %693 = vadd.xlane.f32.xlu0 %v681
      %v694 = vpop.xlane.xlu0 %693
      %695 = vadd.xlane.f32.xlu0 %v682
      %v696 = vpop.xlane.xlu0 %695
      %697 = vadd.xlane.f32.xlu0 %v683
      %v698 = vpop.xlane.xlu0 %697
      %699 = vadd.xlane.f32.xlu0 %v684
      %v700 = vpop.xlane.xlu0 %699
      %v701 = vadd.f32 %v669, %v686
      %v702 = vadd.f32 %v670, %v688
      %v703 = vadd.f32 %v671, %v690
      %v704 = vadd.f32 %v672, %v692
      %v705 = vadd.f32 %v673, %v694
      %v706 = vadd.f32 %v674, %v696
      %v707 = vadd.f32 %v675, %v698
      %v708 = vadd.f32 %v676, %v700
      %709 = vst.msk [vmem:[#allocation4] sm:$0xff] %vm612, %v701
      %710 = vst.msk [vmem:[#allocation4 + $0x8] sm:$0xff] %vm612, %v702
      %711 = vst.msk [vmem:[#allocation4 + $0x10] sm:$0xff] %vm612, %v703
      %712 = vst.msk [vmem:[#allocation4 + $0x18] sm:$0xff] %vm612, %v704
      %713 = vst.msk [vmem:[#allocation4 + $0x20] sm:$0xff] %vm612, %v705
      %714 = vst.msk [vmem:[#allocation4 + $0x28] sm:$0xff] %vm612, %v706
      %715 = vst.msk [vmem:[#allocation4 + $0x30] sm:$0xff] %vm612, %v707
      %716 = vst.msk [vmem:[#allocation4 + $0x38] sm:$0xff] %vm612, %v708
      %p717 = scmp.eq.s32.totalorder %s22, 1
      // Predicated region
      $region41: #{tpu_custom_call.1} parent=35 // pred_check
        %p718 = pneg %p717
      $region42: #{tpu_custom_call.1} parent=35 // pred_check_branch
        %720 = sbr.rel (%p718) target = $region44
      $region43: #{tpu_custom_call.1} parent=35 // pred_region
        %v721 = vld [vmem:[#allocation4] sm:$0xff]
        %v722 = vld [vmem:[#allocation4 + $0x8] sm:$0xff]
        %v723 = vld [vmem:[#allocation4 + $0x10] sm:$0xff]
        %v724 = vld [vmem:[#allocation4 + $0x18] sm:$0xff]
        %v725 = vld [vmem:[#allocation4 + $0x20] sm:$0xff]
        %v726 = vld [vmem:[#allocation4 + $0x28] sm:$0xff]
        %v727 = vld [vmem:[#allocation4 + $0x30] sm:$0xff]
        %v728 = vld [vmem:[#allocation4 + $0x38] sm:$0xff]
        %vm729 = vcmp.gt.f32.partialorder %v721, 0.0
        %vm730 = vcmp.gt.f32.partialorder %v722, 0.0
        %vm731 = vcmp.gt.f32.partialorder %v723, 0.0
        %vm732 = vcmp.gt.f32.partialorder %v724, 0.0
        %vm733 = vcmp.gt.f32.partialorder %v725, 0.0
        %vm734 = vcmp.gt.f32.partialorder %v726, 0.0
        %vm735 = vcmp.gt.f32.partialorder %v727, 0.0
        %vm736 = vcmp.gt.f32.partialorder %v728, 0.0
        %v737 = vld [vmem:[#allocation3] sm:$0xff]
        %v738 = vld [vmem:[#allocation3 + $0x8] sm:$0xff]
        %v739 = vld [vmem:[#allocation3 + $0x10] sm:$0xff]
        %v740 = vld [vmem:[#allocation3 + $0x18] sm:$0xff]
        %v741 = vld [vmem:[#allocation3 + $0x20] sm:$0xff]
        %v742 = vld [vmem:[#allocation3 + $0x28] sm:$0xff]
        %v743 = vld [vmem:[#allocation3 + $0x30] sm:$0xff]
        %v744 = vld [vmem:[#allocation3 + $0x38] sm:$0xff]
        %v745 = vld [vmem:[#allocation2] sm:$0xff]
        %v746 = vld [vmem:[#allocation2 + $0x8] sm:$0xff]
        %v747 = vld [vmem:[#allocation2 + $0x10] sm:$0xff]
        %v748 = vld [vmem:[#allocation2 + $0x18] sm:$0xff]
        %v749 = vld [vmem:[#allocation2 + $0x20] sm:$0xff]
        %v750 = vld [vmem:[#allocation2 + $0x28] sm:$0xff]
        %v751 = vld [vmem:[#allocation2 + $0x30] sm:$0xff]
        %v752 = vld [vmem:[#allocation2 + $0x38] sm:$0xff]
        %v753 = vlog2.pop %v745
        %v754 = vmul.f32 %v753, 0.6931472
        %v755 = vlog2.pop %v746
        %v756 = vmul.f32 %v755, 0.6931472
        %v757 = vlog2.pop %v747
        %v758 = vmul.f32 %v757, 0.6931472
        %v759 = vlog2.pop %v748
        %v760 = vmul.f32 %v759, 0.6931472
        %v761 = vlog2.pop %v749
        %v762 = vmul.f32 %v761, 0.6931472
        %v763 = vlog2.pop %v750
        %v764 = vmul.f32 %v763, 0.6931472
        %v765 = vlog2.pop %v751
        %v766 = vmul.f32 %v765, 0.6931472
        %v767 = vlog2.pop %v752
        %v768 = vmul.f32 %v767, 0.6931472
        %v769 = vmul.f32 %v721, %v754
        %v770 = vmul.f32 %v722, %v756
        %v771 = vmul.f32 %v723, %v758
        %v772 = vmul.f32 %v724, %v760
        %v773 = vmul.f32 %v725, %v762
        %v774 = vmul.f32 %v726, %v764
        %v775 = vmul.f32 %v727, %v766
        %v776 = vmul.f32 %v728, %v768
        %v777 = vsub.f32 %v737, %v769
        %v778 = vsub.f32 %v738, %v770
        %v779 = vsub.f32 %v739, %v771
        %v780 = vsub.f32 %v740, %v772
        %v781 = vsub.f32 %v741, %v773
        %v782 = vsub.f32 %v742, %v774
        %v783 = vsub.f32 %v743, %v775
        %v784 = vsub.f32 %v744, %v776
        %v785 = vsel %vm729, %v721, 1.0
        %v786 = vsel %vm730, %v722, 1.0
        %v787 = vsel %vm731, %v723, 1.0
        %v788 = vsel %vm732, %v724, 1.0
        %v789 = vsel %vm733, %v725, 1.0
        %v790 = vsel %vm734, %v726, 1.0
        %v791 = vsel %vm735, %v727, 1.0
        %v792 = vsel %vm736, %v728, 1.0
        %v793 = vrcp.pop %v785
        %v794 = vmul.f32 %v785, %v793
        %v795 = vsub.f32 1.0, %v794
        %v796 = vmul.f32 %v793, %v795
        %v797 = vadd.f32 %v793, %v796
        %vm798 = vweird.f32 %v785
        %vm799 = vweird.f32 %v793
        %vm800 = vmor %vm798, %vm799
        %v801 = vsel %vm800, %v793, %v797
        %v802 = vand.u32 2147483647, %v785
        %vm803 = vcmp.eq.f32.partialorder %v802, 8.507059e+37
        %v804 = vand.u32 %v785, 2147483648
        %v805 = vor.u32 1.1754944e-38, %v804
        %v806 = vsel %vm803, %v805, %v801
        %v807 = vmul.f32 %v777, %v806
        %v808 = vrcp.pop %v786
        %v809 = vmul.f32 %v786, %v808
        %v810 = vsub.f32 1.0, %v809
        %v811 = vmul.f32 %v808, %v810
        %v812 = vadd.f32 %v808, %v811
        %vm813 = vweird.f32 %v786
        %vm814 = vweird.f32 %v808
        %vm815 = vmor %vm813, %vm814
        %v816 = vsel %vm815, %v808, %v812
        %v817 = vand.u32 2147483647, %v786
        %vm818 = vcmp.eq.f32.partialorder %v817, 8.507059e+37
        %v819 = vand.u32 %v786, 2147483648
        %v820 = vor.u32 1.1754944e-38, %v819
        %v821 = vsel %vm818, %v820, %v816
        %v822 = vmul.f32 %v778, %v821
        %v823 = vrcp.pop %v787
        %v824 = vmul.f32 %v787, %v823
        %v825 = vsub.f32 1.0, %v824
        %v826 = vmul.f32 %v823, %v825
        %v827 = vadd.f32 %v823, %v826
        %vm828 = vweird.f32 %v787
        %vm829 = vweird.f32 %v823
        %vm830 = vmor %vm828, %vm829
        %v831 = vsel %vm830, %v823, %v827
        %v832 = vand.u32 2147483647, %v787
        %vm833 = vcmp.eq.f32.partialorder %v832, 8.507059e+37
        %v834 = vand.u32 %v787, 2147483648
        %v835 = vor.u32 1.1754944e-38, %v834
        %v836 = vsel %vm833, %v835, %v831
        %v837 = vmul.f32 %v779, %v836
        %v838 = vrcp.pop %v788
        %v839 = vmul.f32 %v788, %v838
        %v840 = vsub.f32 1.0, %v839
        %v841 = vmul.f32 %v838, %v840
        %v842 = vadd.f32 %v838, %v841
        %vm843 = vweird.f32 %v788
        %vm844 = vweird.f32 %v838
        %vm845 = vmor %vm843, %vm844
        %v846 = vsel %vm845, %v838, %v842
        %v847 = vand.u32 2147483647, %v788
        %vm848 = vcmp.eq.f32.partialorder %v847, 8.507059e+37
        %v849 = vand.u32 %v788, 2147483648
        %v850 = vor.u32 1.1754944e-38, %v849
        %v851 = vsel %vm848, %v850, %v846
        %v852 = vmul.f32 %v780, %v851
        %v853 = vrcp.pop %v789
        %v854 = vmul.f32 %v789, %v853
        %v855 = vsub.f32 1.0, %v854
        %v856 = vmul.f32 %v853, %v855
        %v857 = vadd.f32 %v853, %v856
        %vm858 = vweird.f32 %v789
        %vm859 = vweird.f32 %v853
        %vm860 = vmor %vm858, %vm859
        %v861 = vsel %vm860, %v853, %v857
        %v862 = vand.u32 2147483647, %v789
        %vm863 = vcmp.eq.f32.partialorder %v862, 8.507059e+37
        %v864 = vand.u32 %v789, 2147483648
        %v865 = vor.u32 1.1754944e-38, %v864
        %v866 = vsel %vm863, %v865, %v861
        %v867 = vmul.f32 %v781, %v866
        %v868 = vrcp.pop %v790
        %v869 = vmul.f32 %v790, %v868
        %v870 = vsub.f32 1.0, %v869
        %v871 = vmul.f32 %v868, %v870
        %v872 = vadd.f32 %v868, %v871
        %vm873 = vweird.f32 %v790
        %vm874 = vweird.f32 %v868
        %vm875 = vmor %vm873, %vm874
        %v876 = vsel %vm875, %v868, %v872
        %v877 = vand.u32 2147483647, %v790
        %vm878 = vcmp.eq.f32.partialorder %v877, 8.507059e+37
        %v879 = vand.u32 %v790, 2147483648
        %v880 = vor.u32 1.1754944e-38, %v879
        %v881 = vsel %vm878, %v880, %v876
        %v882 = vmul.f32 %v782, %v881
        %v883 = vrcp.pop %v791
        %v884 = vmul.f32 %v791, %v883
        %v885 = vsub.f32 1.0, %v884
        %v886 = vmul.f32 %v883, %v885
        %v887 = vadd.f32 %v883, %v886
        %vm888 = vweird.f32 %v791
        %vm889 = vweird.f32 %v883
        %vm890 = vmor %vm888, %vm889
        %v891 = vsel %vm890, %v883, %v887
        %v892 = vand.u32 2147483647, %v791
        %vm893 = vcmp.eq.f32.partialorder %v892, 8.507059e+37
        %v894 = vand.u32 %v791, 2147483648
        %v895 = vor.u32 1.1754944e-38, %v894
        %v896 = vsel %vm893, %v895, %v891
        %v897 = vmul.f32 %v783, %v896
        %v898 = vrcp.pop %v792
        %v899 = vmul.f32 %v792, %v898
        %v900 = vsub.f32 1.0, %v899
        %v901 = vmul.f32 %v898, %v900
        %v902 = vadd.f32 %v898, %v901
        %vm903 = vweird.f32 %v792
        %vm904 = vweird.f32 %v898
        %vm905 = vmor %vm903, %vm904
        %v906 = vsel %vm905, %v898, %v902
        %v907 = vand.u32 2147483647, %v792
        %vm908 = vcmp.eq.f32.partialorder %v907, 8.507059e+37
        %v909 = vand.u32 %v792, 2147483648
        %v910 = vor.u32 1.1754944e-38, %v909
        %v911 = vsel %vm908, %v910, %v906
        %v912 = vmul.f32 %v784, %v911
        %v913 = vsel %vm729, %v807, 0.0
        %v914 = vsel %vm730, %v822, 0.0
        %v915 = vsel %vm731, %v837, 0.0
        %v916 = vsel %vm732, %v852, 0.0
        %v917 = vsel %vm733, %v867, 0.0
        %v918 = vsel %vm734, %v882, 0.0
        %v919 = vsel %vm735, %v897, 0.0
        %v920 = vsel %vm736, %v912, 0.0
        %v921 = vsub.f32 0.0, %v913
        %v922 = vsub.f32 0.0, %v914
        %v923 = vsub.f32 0.0, %v915
        %v924 = vsub.f32 0.0, %v916
        %v925 = vsub.f32 0.0, %v917
        %v926 = vsub.f32 0.0, %v918
        %v927 = vsub.f32 0.0, %v919
        %v928 = vsub.f32 0.0, %v920
        %v929 = vmul.f32 %v921, 0.5
        %v930 = vmul.f32 %v922, 0.5
        %v931 = vmul.f32 %v923, 0.5
        %v932 = vmul.f32 %v924, 0.5
        %v933 = vmul.f32 %v925, 0.5
        %v934 = vmul.f32 %v926, 0.5
        %v935 = vmul.f32 %v927, 0.5
        %v936 = vmul.f32 %v928, 0.5
        %937 = vst.msk [vmem:[%s304] sm:$0xff] %vm612, %v929
        %938 = vst.msk [vmem:[%s304 + $0x8] sm:$0xff] %vm612, %v930
        %939 = vst.msk [vmem:[%s304 + $0x10] sm:$0xff] %vm612, %v931
        %940 = vst.msk [vmem:[%s304 + $0x18] sm:$0xff] %vm612, %v932
        %941 = vst.msk [vmem:[%s304 + $0x20] sm:$0xff] %vm612, %v933
        %942 = vst.msk [vmem:[%s304 + $0x28] sm:$0xff] %vm612, %v934
        %943 = vst.msk [vmem:[%s304 + $0x30] sm:$0xff] %vm612, %v935
        %944 = vst.msk [vmem:[%s304 + $0x38] sm:$0xff] %vm612, %v936
        %v945 = vsel %vm729, 1, 0
        %v946 = vsel %vm730, 1, 0
        %v947 = vsel %vm731, 1, 0
        %v948 = vsel %vm732, 1, 0
        %v949 = vsel %vm733, 1, 0
        %v950 = vsel %vm734, 1, 0
        %v951 = vsel %vm735, 1, 0
        %v952 = vsel %vm736, 1, 0
        %v953 = vcvt.s32.f32 %v945
        %v954 = vcvt.s32.f32 %v946
        %v955 = vcvt.s32.f32 %v947
        %v956 = vcvt.s32.f32 %v948
        %v957 = vcvt.s32.f32 %v949
        %v958 = vcvt.s32.f32 %v950
        %v959 = vcvt.s32.f32 %v951
        %v960 = vcvt.s32.f32 %v952
        %961 = vst.msk [vmem:[%s310] sm:$0xff] %vm612, %v953
        %962 = vst.msk [vmem:[%s310 + $0x8] sm:$0xff] %vm612, %v954
        %963 = vst.msk [vmem:[%s310 + $0x10] sm:$0xff] %vm612, %v955
        %964 = vst.msk [vmem:[%s310 + $0x18] sm:$0xff] %vm612, %v956
        %965 = vst.msk [vmem:[%s310 + $0x20] sm:$0xff] %vm612, %v957
        %966 = vst.msk [vmem:[%s310 + $0x28] sm:$0xff] %vm612, %v958
        %967 = vst.msk [vmem:[%s310 + $0x30] sm:$0xff] %vm612, %v959
        %968 = vst.msk [vmem:[%s310 + $0x38] sm:$0xff] %vm612, %v960
      $region44: #{tpu_custom_call.1} parent=35 // pred_fallthru
        _
      %s969 = smul.u32 8, %s21
      %p970 = scmp.lt.s32.totalorder %s969, 31
      %s971 = scalar_select %p970, %s969, 31
      %s972 = smul.addr %s971, 8
      %s973 = scalar_lea.vmem %s4, %s972
      %s974 = smul.u32 8, %s21
      %p975 = scmp.lt.s32.totalorder %s974, 31
      %s976 = scalar_select %p975, %s974, 31
      %s977 = smul.addr %s976, 8
      %s978 = scalar_lea.vmem %s5, %s977
      // Predicated region
      $region45: #{tpu_custom_call.1} parent=35 // pred_check
        %p979 = pneg %p151
      $region46: #{tpu_custom_call.1} parent=35 // pred_check_branch
        %981 = sbr.rel (%p979) target = $region48
      $region47: #{tpu_custom_call.1} parent=35 // pred_region
        %s982 = smul.u32 8, %s21
      $region48: #{tpu_custom_call.1} parent=35 // pred_fallthru
        _
      // Predicated region
      $region49: #{tpu_custom_call.1} parent=35 // pred_check
        %p983 = pneg %p177
      $region50: #{tpu_custom_call.1} parent=35 // pred_check_branch
        %985 = sbr.rel (%p983) target = $region52
      $region51: #{tpu_custom_call.1} parent=35 // pred_region
        %s986 = smul.u32 8, %s21
      $region52: #{tpu_custom_call.1} parent=35 // pred_fallthru
        _
    $region36: #{tpu_custom_call.1} parent=5 // pred_fallthru
      _
    %p987 = scmp.le.s32.totalorder 2, %s12
    // Predicated region
    $region53: #{tpu_custom_call.1} parent=5 // pred_check
      %p988 = pneg %p987
    $region54: #{tpu_custom_call.1} parent=5 // pred_check_branch
      %990 = sbr.rel (%p988) target = $region56
    $region55: #{tpu_custom_call.1} parent=5 // pred_region
      %s991 = ssub.s32 %s12, 2
      // Predicated region
      $region57: #{tpu_custom_call.1} parent=55 // pred_check
        %p992 = pneg %p157
      $region58: #{tpu_custom_call.1} parent=55 // pred_check_branch
        %994 = sbr.rel (%p992) target = $region60
      $region59: #{tpu_custom_call.1} parent=55 // pred_region
        %s995 = smul.u32 8, %s23
        %p996 = scmp.lt.s32.totalorder %s995, 31
        %s997 = scalar_select %p996, %s995, 31
        %s998 = smul.addr %s997, 8
        %s999 = scalar_lea.vmem %s4, %s998
      $region60: #{tpu_custom_call.1} parent=55 // pred_fallthru
        _
      // Predicated region
      $region61: #{tpu_custom_call.1} parent=55 // pred_check
        %p1000 = pneg %p183
      $region62: #{tpu_custom_call.1} parent=55 // pred_check_branch
        %1002 = sbr.rel (%p1000) target = $region64
      $region63: #{tpu_custom_call.1} parent=55 // pred_region
        %s1003 = smul.u32 8, %s23
        %p1004 = scmp.lt.s32.totalorder %s1003, 31
        %s1005 = scalar_select %p1004, %s1003, 31
        %s1006 = smul.addr %s1005, 8
        %s1007 = scalar_lea.vmem %s5, %s1006
      $region64: #{tpu_custom_call.1} parent=55 // pred_fallthru
        _
    $region56: #{tpu_custom_call.1} parent=5 // pred_fallthru
      _
  $region6: #{tpu_custom_call.1} parent=0 // loop_footer
    %s16 = sadd.s32 1, %s12
  $region7: #{tpu_custom_call.1} parent=0 // loop_footer_branch
    %11 = sbr.rel target = $region3
  $region8: #{tpu_custom_call.1} parent=0 // loop_exit
    _

</llo_original>
